<compile_context>
chip_gen: v6e
topology: v6e:2x2x1
jax: 0.10.0
libtpu: 0.0.40
codegen_flags: <defaults>
</compile_context>

<pallas_src>
import jax
import jax.numpy as jnp
from jax import lax
from jax.experimental import pallas as pl
from jax.experimental.pallas import tpu as pltpu


def critic_kernel(x_ref, w1_ref, b1_ref, w2_ref, b2_ref, o_ref):
    # First linear on the MXU: [TM, S] @ [S, 128], f32 accumulation.
    h = jnp.dot(x_ref[...], w1_ref[...], preferred_element_type=jnp.float32)
    h = h + b1_ref[...]                      # bias broadcast over rows (VPU)
    # Dropout (eval/inference) -> identity, then ReLU on the VPU (f32).
    h = jnp.maximum(h, 0.0)
    # Second linear (out_features=1) as a lane-dense contraction on the MXU:
    # w2 [1, 128] contracted with h [TM, 128] over the 128 axis -> [1, TM].
    v = lax.dot_general(
        w2_ref[...], h,
        dimension_numbers=(((1,), (1,)), ((), ())),
        preferred_element_type=jnp.float32)
    # b2 is a scalar read from SMEM; store lane-dense (1, 1, TM).
    o_ref[...] = (v + b2_ref[0, 0]).reshape(o_ref.shape).astype(o_ref.dtype)


def discrete_critic_forward(x, w1, b1, w2, b2):
    """x: [B, S] (f32 or bf16). w1: [S, 128], b1: [1, 128], w2: [1, 128], b2: [1, 1]."""
    B, S = x.shape
    H = w1.shape[1]

    # Never cast x in the wrapper (extra HBM pass); casting the tiny weight
    # matrix to match a bf16 producer is essentially free.
    if w1.dtype != x.dtype:
        w1 = w1.astype(x.dtype)

    isz = x.dtype.itemsize
    align = 16 if isz == 2 else 8            # bf16 min sublane tile is 16

    # --- VMEM-aware batch-tile selection (safe on v5e / v6e / v7x) ---------
    # Keep the double-buffered x tile under ~12 MiB.
    x_tile_budget = 12 * 1024 * 1024
    tm_cap = max(align, min(4096, x_tile_budget // (2 * S * isz)))
    tm_cap = (tm_cap // align) * align

    if B <= tm_cap:
        if B >= 2 * align:
            # >= 2 grid steps so a v7x megacore can shard the "parallel" axis.
            tm = ((pl.cdiv(B, 2) + align - 1) // align) * align
        else:
            tm = B                           # single block == full array dim
    else:
        tm = tm_cap
    num_tiles = pl.cdiv(B, tm)

    cost = pl.CostEstimate(
        flops=2 * B * S * H + 2 * B * H,
        transcendentals=0,
        bytes_accessed=B * S * isz + S * H * w1.dtype.itemsize
        + 2 * H * 4 + 4 + num_tiles * tm * 4,
    )

    out = pl.pallas_call(
        critic_kernel,
        out_shape=jax.ShapeDtypeStruct((num_tiles, 1, tm), jnp.float32),
        grid=(num_tiles,),
        in_specs=[
            # x: tiled along batch, lane-dense feature dim; partial last block
            # (no wrapper pad) is handled by Pallas.
            pl.BlockSpec((tm, S), lambda i: (i, 0), memory_space=pltpu.VMEM),
            # Weights / biases: constant index_map -> VMEM-resident.
            pl.BlockSpec((S, H), lambda i: (0, 0), memory_space=pltpu.VMEM),
            pl.BlockSpec((1, H), lambda i: (0, 0), memory_space=pltpu.VMEM),
            pl.BlockSpec((1, H), lambda i: (0, 0), memory_space=pltpu.VMEM),
            # b2: (1,1) scalar in SMEM.
            pl.BlockSpec(memory_space=pltpu.SMEM),
        ],
        # Lane-dense output row per tile: unmasked wide stores / wide DMA.
        out_specs=pl.BlockSpec((1, 1, tm), lambda i: (i, 0, 0),
                               memory_space=pltpu.VMEM),
        compiler_params=pltpu.CompilerParams(
            dimension_semantics=("parallel",),
            vmem_limit_bytes=32 * 1024 * 1024),
        cost_estimate=cost,
    )(x, w1, b1, w2, b2)

    # Tiny reshape back to (B, 1); tail rows of the last tile are dropped.
    return out.reshape(num_tiles * tm)[:B].reshape(B, 1)


def init_params(key, state_dim, hidden=128):
    """Deterministic init mimicking nn.Linear default: U(-1/sqrt(fan_in), 1/sqrt(fan_in))."""
    k1, k2, k3, k4 = jax.random.split(key, 4)
    bound1 = 1.0 / jnp.sqrt(state_dim)
    bound2 = 1.0 / jnp.sqrt(hidden)
    # w1 stored [in, out]; w2 stored [out, in] == [1, 128] (lane-dense).
    w1 = jax.random.uniform(k1, (state_dim, hidden), jnp.float32, -bound1, bound1)
    b1 = jax.random.uniform(k2, (1, hidden), jnp.float32, -bound1, bound1)
    w2 = jax.random.uniform(k3, (1, hidden), jnp.float32, -bound2, bound2)
    b2 = jax.random.uniform(k4, (1, 1), jnp.float32, -bound2, bound2)
    return w1, b1, w2, b2


def _reference(x, w1, b1, w2, b2):
    xf = x.astype(jnp.float32)
    h = jnp.maximum(jnp.dot(xf, w1.astype(jnp.float32)) + b1, 0.0)
    return jnp.dot(h, w2.T) + b2


if __name__ == "__main__":
    key = jax.random.PRNGKey(0)
    k_x, k_x2, k_p = jax.random.split(key, 3)

    B, STATE_DIM = 8, 32
    w1, b1, w2, b2 = init_params(k_p, STATE_DIM)

    # Small batch (single tile).
    x = jax.random.normal(k_x, (B, STATE_DIM), jnp.float32)
    out = jax.block_until_ready(discrete_critic_forward(x, w1, b1, w2, b2))
    ref = _reference(x, w1, b1, w2, b2)
    assert out.shape == (B, 1)
    assert jnp.allclose(out, ref, atol=1e-4, rtol=1e-4)

    # Ragged batch exercises the pad-free partial-last-block path (2 tiles).
    B2 = 70
    x2 = jax.random.normal(k_x2, (B2, STATE_DIM), jnp.float32)
    out2 = jax.block_until_ready(discrete_critic_forward(x2, w1, b1, w2, b2))
    ref2 = _reference(x2, w1, b1, w2, b2)
    assert out2.shape == (B2, 1)
    assert jnp.allclose(out2, ref2, atol=1e-4, rtol=1e-4)

    # bf16 activations supplied directly by the producer (no wrapper cast).
    x_bf16 = x.astype(jnp.bfloat16)
    out_bf = jax.block_until_ready(
        discrete_critic_forward(x_bf16, w1, b1, w2, b2))
    assert out_bf.shape == (B, 1)
    assert jnp.allclose(out_bf, ref, atol=5e-2, rtol=5e-2)

    print("KERNEL_OK")
</pallas_src>

<mosaic_0001>
module attributes {stable_mosaic.version = 11 : i64} {
  func.func @critic_kernel(%arg0: i32, %arg1: memref<8x32xf32, #tpu.memory_space<vmem>>, %arg2: memref<32x128xf32, #tpu.memory_space<vmem>>, %arg3: memref<1x128xf32, #tpu.memory_space<vmem>>, %arg4: memref<1x128xf32, #tpu.memory_space<vmem>>, %arg5: memref<1x1xf32, #tpu.memory_space<smem>>, %arg6: memref<1x1x8xf32, #tpu.memory_space<vmem>>) attributes {dimension_semantics = [#tpu.dimension_semantics<parallel>], iteration_bounds = array<i64: 1>, scalar_prefetch = 0 : i64, scratch_operands = 0 : i64, tpu.core_type = #tpu.core_type<tc>, window_params = [{transform_indices = @transform_0, window_bounds = array<i64: 8, 32>}, {pipeline_mode = #tpu.pipeline_mode<synchronous>, transform_indices = @transform_1, window_bounds = array<i64: 32, 128>}, {pipeline_mode = #tpu.pipeline_mode<synchronous>, transform_indices = @transform_2, window_bounds = array<i64: 1, 128>}, {pipeline_mode = #tpu.pipeline_mode<synchronous>, transform_indices = @transform_3, window_bounds = array<i64: 1, 128>}, {transform_indices = @transform_4, window_bounds = array<i64: 1, 1>}, {transform_indices = @transform_5, window_bounds = array<i64: 1, 1, 8>}]} {
    %c0 = arith.constant 0 : index
    %c0_0 = arith.constant 0 : index
    %0 = vector.load %arg1[%c0, %c0_0] : memref<8x32xf32, #tpu.memory_space<vmem>>, vector<8x32xf32>
    %c0_1 = arith.constant 0 : index
    %c0_2 = arith.constant 0 : index
    %1 = vector.load %arg2[%c0_1, %c0_2] : memref<32x128xf32, #tpu.memory_space<vmem>>, vector<32x128xf32>
    %cst = arith.constant dense<0.000000e+00> : vector<8x128xf32>
    %2 = tpu.matmul %0, %1, %cst {dimension_numbers = #tpu.dot_dimension_numbers<[1], [0], [0], [1], [0, 0, 1, 1], [], []>} : vector<8x32xf32>, vector<32x128xf32>, vector<8x128xf32> -> vector<8x128xf32>
    %c0_3 = arith.constant 0 : index
    %c0_4 = arith.constant 0 : index
    %3 = vector.load %arg3[%c0_3, %c0_4] : memref<1x128xf32, #tpu.memory_space<vmem>>, vector<1x128xf32>
    %4 = vector.broadcast %3 : vector<1x128xf32> to vector<8x128xf32>
    %5 = arith.addf %2, %4 : vector<8x128xf32>
    %cst_5 = arith.constant 0.000000e+00 : f32
    %6 = vector.broadcast %cst_5 : f32 to vector<8x128xf32>
    %7 = arith.maximumf %5, %6 : vector<8x128xf32>
    %c0_6 = arith.constant 0 : index
    %c0_7 = arith.constant 0 : index
    %8 = vector.load %arg4[%c0_6, %c0_7] : memref<1x128xf32, #tpu.memory_space<vmem>>, vector<1x128xf32>
    %cst_8 = arith.constant dense<0.000000e+00> : vector<1x8xf32>
    %9 = tpu.matmul %8, %7, %cst_8 {dimension_numbers = #tpu.dot_dimension_numbers<[1], [1], [0], [0], [0, 0, 1, 0], [], []>} : vector<1x128xf32>, vector<8x128xf32>, vector<1x8xf32> -> vector<1x8xf32>
    %c0_9 = arith.constant 0 : index
    %c0_10 = arith.constant 0 : index
    %10 = memref.load %arg5[%c0_9, %c0_10] : memref<1x1xf32, #tpu.memory_space<smem>>
    %11 = vector.broadcast %10 : f32 to vector<1x8xf32>
    %12 = arith.addf %9, %11 : vector<1x8xf32>
    %13 = vector.shape_cast %12 : vector<1x8xf32> to vector<1x1x8xf32>
    %c0_11 = arith.constant 0 : index
    %c0_12 = arith.constant 0 : index
    %c0_13 = arith.constant 0 : index
    %14 = vector.load %arg6[%c0_11, %c0_12, %c0_13] : memref<1x1x8xf32, #tpu.memory_space<vmem>>, vector<1x1x8xf32>
    tpu.vector_store %arg6[%c0_11, %c0_12, %c0_13], %13 {strides = array<i32>} : memref<1x1x8xf32, #tpu.memory_space<vmem>>, vector<1x1x8xf32>,
    return
  }
  func.func @transform_0(%arg0: i32) -> (i32, i32) {
    %c0_i32 = arith.constant 0 : i32
    %c0_i32_0 = arith.constant 0 : i32
    return %arg0, %c0_i32 : i32, i32
  }
  func.func @transform_1(%arg0: i32) -> (i32, i32) {
    %c0_i32 = arith.constant 0 : i32
    %c0_i32_0 = arith.constant 0 : i32
    %c0_i32_1 = arith.constant 0 : i32
    return %c0_i32, %c0_i32_0 : i32, i32
  }
  func.func @transform_2(%arg0: i32) -> (i32, i32) {
    %c0_i32 = arith.constant 0 : i32
    %c0_i32_0 = arith.constant 0 : i32
    %c0_i32_1 = arith.constant 0 : i32
    return %c0_i32, %c0_i32_0 : i32, i32
  }
  func.func @transform_3(%arg0: i32) -> (i32, i32) {
    %c0_i32 = arith.constant 0 : i32
    %c0_i32_0 = arith.constant 0 : i32
    %c0_i32_1 = arith.constant 0 : i32
    return %c0_i32, %c0_i32_0 : i32, i32
  }
  func.func @transform_4(%arg0: i32) -> (i32, i32) {
    %c0_i32 = arith.constant 0 : i32
    %c0_i32_0 = arith.constant 0 : i32
    %c0_i32_1 = arith.constant 0 : i32
    return %c0_i32, %c0_i32_0 : i32, i32
  }
  func.func @transform_5(%arg0: i32) -> (i32, i32, i32) {
    %c0_i32 = arith.constant 0 : i32
    %c0_i32_0 = arith.constant 0 : i32
    %c0_i32_1 = arith.constant 0 : i32
    return %arg0, %c0_i32, %c0_i32_0 : i32, i32, i32
  }
}

</mosaic_0001>

<llo_original>
// kernel: tpu_custom_call.1
$region0: #{tpu_custom_call.1}
  #allocation0 [shape = 'u32[]', space=smem, size = 0x4, offset = 0x4, fixed_abs, tag = 'smem constant byte address 0x4 - core index']
  #allocation1 [shape = 'u32[144,128]{1,0:T(1,128)}', space=vmem, size = 0x12000, scoped, tag = 'internal scratch']
  #allocation2 [shape = 'f32[1,1]{1,0:T(1,128)S(6)}', space=smem, size = 0x200, scoped, tag = 'scoped memory for tpu_custom_call.1']
  %s0 = inlined_call_operand.hbm [shape: f32[8,32], index: 0, kind: input, shape index: {}]
  %s1 = inlined_call_operand.hbm [shape: f32[32,128], index: 1, kind: input, shape index: {}]
  %s2 = inlined_call_operand.vmem [shape: f32[1,128], index: 2, kind: input, shape index: {}]
  %s3 = inlined_call_operand.vmem [shape: f32[1,128], index: 3, kind: input, shape index: {}]
  %s4 = inlined_call_operand.<no memory space> [shape: f32[1,1], index: 4, kind: input, shape index: {}]
  %s5 = inlined_call_operand.hbm [shape: f32[1,1,8], index: 5, kind: output, shape index: {}]
  %s6 = sld [smem:[#allocation0]]
  $region38: #{tpu_custom_call.1} parent=0
    _
  %s8 = ssub.s32 1, %s6
  %s9 = scalar_select 0, %s8, %s6
  %10 = sst [smem:[#allocation2]] %s4
  $region1: #{tpu_custom_call.1} parent=0
    #allocation3 [shape = 'u8[4096]{0}', space=vmem, size = 0x1000, scoped, tag = 'input window, operand 0, single buffered']
    #allocation4 [shape = 's32[1]{0}', space=sflag, size = 0x4, scoped, tag = 'scoped memory for tpu_custom_call.1']
    #allocation5 [shape = 's32[1]{0}', space=sflag, size = 0x4, scoped, tag = 'scoped memory for tpu_custom_call.1']
    #allocation6 [shape = 'u8[16384]{0}', space=vmem, size = 0x4000, scoped, tag = 'input window, operand 1, single buffered']
    #allocation7 [shape = 's32[1]{0}', space=sflag, size = 0x4, scoped, tag = 'scoped memory for tpu_custom_call.1']
    #allocation8 [shape = 'u8[512]{0}', space=vmem, size = 0x400, scoped, tag = 'output window, operand 0, single buffered']
    %11 = vsyncpa [#allocation4], 0
    %12 = vsyncpa [#allocation7], 0
    %13 = vsyncpa [#allocation5], 0
    // Predicated region
    $region2: #{tpu_custom_call.1} parent=1 // pred_check
      _
    $region3: #{tpu_custom_call.1} parent=1 // pred_check_branch
      %15 = sbr.rel (0) target = $region5
    $region4: #{tpu_custom_call.1} parent=1 // pred_region
      %s17 = ssub.s32 128, 128
      %18 = vsyncadd [#allocation4], %s17
      %s20 = sshll.u32 [#allocation3], 4
      %s21 = int_to_ptr.vmem [resolvable:$true] %s20
      %23 = dma.hbm_to_vmem [thread:$0]  %s0, 128, %s21, [#allocation4]
    $region5: #{tpu_custom_call.1} parent=1 // pred_fallthru
      _
    // Predicated region
    $region6: #{tpu_custom_call.1} parent=1 // pred_check
      _
    $region7: #{tpu_custom_call.1} parent=1 // pred_check_branch
      %25 = sbr.rel (0) target = $region9
    $region8: #{tpu_custom_call.1} parent=1 // pred_region
      %s27 = ssub.s32 512, 512
      %28 = vsyncadd [#allocation7], %s27
      %s29 = sshll.u32 [#allocation6], 4
      %s30 = int_to_ptr.vmem [resolvable:$true] %s29
      %35 = dma.hbm_to_vmem [thread:$0]  %s1, 512, %s30, [#allocation7], 128, 128, 8
    $region9: #{tpu_custom_call.1} parent=1 // pred_fallthru
      _
    // Predicated region
    $region10: #{tpu_custom_call.1} parent=1 // pred_check
      _
    $region11: #{tpu_custom_call.1} parent=1 // pred_check_branch
      %37 = sbr.rel (0) target = $region13
    $region12: #{tpu_custom_call.1} parent=1 // pred_region
      _
    $region13: #{tpu_custom_call.1} parent=1 // pred_fallthru
      _
    // Predicated region
    $region14: #{tpu_custom_call.1} parent=1 // pred_check
      _
    $region15: #{tpu_custom_call.1} parent=1 // pred_check_branch
      %39 = sbr.rel (0) target = $region17
    $region16: #{tpu_custom_call.1} parent=1 // pred_region
      _
    $region17: #{tpu_custom_call.1} parent=1 // pred_fallthru
      _
    // Predicated region
    $region18: #{tpu_custom_call.1} parent=1 // pred_check
      _
    $region19: #{tpu_custom_call.1} parent=1 // pred_check_branch
      %41 = sbr.rel (0) target = $region21
    $region20: #{tpu_custom_call.1} parent=1 // pred_region
      _
    $region21: #{tpu_custom_call.1} parent=1 // pred_fallthru
      _
    // Predicated region
    $region22: #{tpu_custom_call.1} parent=1 // pred_check
      _
    $region23: #{tpu_custom_call.1} parent=1 // pred_check_branch
      %43 = sbr.rel (0) target = $region25
    $region24: #{tpu_custom_call.1} parent=1 // pred_region
      %44 = dma.done [#allocation4], 128
    $region25: #{tpu_custom_call.1} parent=1 // pred_fallthru
      _
    // Predicated region
    $region26: #{tpu_custom_call.1} parent=1 // pred_check
      _
    $region27: #{tpu_custom_call.1} parent=1 // pred_check_branch
      %46 = sbr.rel (0) target = $region29
    $region28: #{tpu_custom_call.1} parent=1 // pred_region
      %47 = dma.done [#allocation7], 512
    $region29: #{tpu_custom_call.1} parent=1 // pred_fallthru
      _
    %v48 = vld [vmem:[#allocation3] sm:$0xff]
    %v49 = vld [vmem:[#allocation6] sm:$0xff]
    %v50 = vld [vmem:[#allocation6 + $0x8] sm:$0xff]
    %v51 = vld [vmem:[#allocation6 + $0x10] sm:$0xff]
    %v52 = vld [vmem:[#allocation6 + $0x18] sm:$0xff]
    %v53 = vld [vmem:[%s2] sm:$0x1]
    %v55 = vlaneseq
    %v56 = vshrl.u32 %v55, 7
    %v57 = vsub.s32 0, %v56
    %v58 = vrot.slane %v53, %v57
    %vm60 = vcmask 261120
    %v62 = vsel %vm60, %v48, 0
    %64 = vmatprep.subr.mxu0 0.0
    %65 = vmatpush1.msra.mxu0 0.0
    %66 = vmatprep.subr.mxu0 0.0
    %67 = vmatpush1.msra.mxu0 0.0
    %68 = vmatprep.subr.mxu0 0.0
    %69 = vmatpush1.msra.mxu0 0.0
    %70 = vmatprep.subr.mxu0 0.0
    %71 = vmatpush1.msra.mxu0 0.0
    %72 = vmatprep.subr.mxu0 0.0
    %73 = vmatpush1.msra.mxu0 0.0
    %74 = vmatprep.subr.mxu0 0.0
    %75 = vmatpush1.msra.mxu0 0.0
    %76 = vmatprep.subr.mxu0 0.0
    %77 = vmatpush1.msra.mxu0 0.0
    %78 = vmatprep.subr.mxu0 0.0
    %79 = vmatpush1.msra.mxu0 0.0
    %80 = vmatprep.subr.mxu0 0.0
    %81 = vmatpush1.msra.mxu0 0.0
    %82 = vmatprep.subr.mxu0 0.0
    %83 = vmatpush1.msra.mxu0 0.0
    %84 = vmatprep.subr.mxu0 0.0
    %85 = vmatpush1.msra.mxu0 0.0
    %86 = vmatprep.subr.mxu0 0.0
    %87 = vmatpush1.msra.mxu0 0.0
    %88 = vmatprep.subr.mxu0 0.0
    %89 = vmatpush1.msra.mxu0 %v52
    %90 = vmatprep.subr.mxu0 0.0
    %91 = vmatpush1.msra.mxu0 %v51
    %92 = vmatprep.subr.mxu0 0.0
    %93 = vmatpush1.msra.mxu0 %v50
    %94 = vmatprep.subr.mxu0 0.0
    %95 = vmatpush1.msra.mxu0 %v49
    %96 = vmatprep.subr.mxu0 0.0
    %97 = vmatpush2.msra.mxu0 0.0
    %98 = vmatprep.subr.mxu0 0.0
    %99 = vmatpush2.msra.mxu0 0.0
    %100 = vmatprep.subr.mxu0 0.0
    %101 = vmatpush2.msra.mxu0 0.0
    %102 = vmatprep.subr.mxu0 0.0
    %103 = vmatpush2.msra.mxu0 0.0
    %104 = vmatprep.subr.mxu0 0.0
    %105 = vmatpush2.msra.mxu0 0.0
    %106 = vmatprep.subr.mxu0 0.0
    %107 = vmatpush2.msra.mxu0 0.0
    %108 = vmatprep.subr.mxu0 0.0
    %109 = vmatpush2.msra.mxu0 0.0
    %110 = vmatprep.subr.mxu0 0.0
    %111 = vmatpush2.msra.mxu0 0.0
    %112 = vmatprep.subr.mxu0 0.0
    %113 = vmatpush2.msra.mxu0 0.0
    %114 = vmatprep.subr.mxu0 0.0
    %115 = vmatpush2.msra.mxu0 0.0
    %116 = vmatprep.subr.mxu0 0.0
    %117 = vmatpush2.msra.mxu0 0.0
    %118 = vmatprep.subr.mxu0 0.0
    %119 = vmatpush2.msra.mxu0 0.0
    %120 = vmatprep.subr.mxu0 0.0
    %121 = vmatpush2.msra.mxu0 0.0
    %122 = vmatprep.subr.mxu0 0.0
    %123 = vmatpush2.msra.mxu0 0.0
    %124 = vmatprep.subr.mxu0 0.0
    %125 = vmatpush2.msra.mxu0 0.0
    %126 = vmatprep.subr.mxu0 0.0
    %127 = vmatpush2.msra.mxu0 0.0
    %128 = vmatprep.mubr.f32.mxu0 0.0
    %129 = vmatmul.mubr.f32.gmra.mxu0 %v62
    %v130 = vpop.f32.mrf.mxu0
    %v131 = vadd.f32 %v58, %v130
    %v132 = vpop.f32.mrf.mxu0
    %133 = vdwg.mxu0
    %v134 = vmax.f32 %v131, 0.0
    %v135 = vld [vmem:[%s3] sm:$0x1]
    %s136 = sld [smem:[#allocation2]]
    %v137 = vstv %s136
    %138 = vmatprep.subr.mxu0 0.0
    %139 = vmatpush1.xpose.msra.mxu0 0.0
    %140 = vmatprep.subr.mxu0 0.0
    %141 = vmatpush1.xpose.msra.mxu0 0.0
    %142 = vmatprep.subr.mxu0 0.0
    %143 = vmatpush1.xpose.msra.mxu0 0.0
    %144 = vmatprep.subr.mxu0 0.0
    %145 = vmatpush1.xpose.msra.mxu0 0.0
    %146 = vmatprep.subr.mxu0 0.0
    %147 = vmatpush1.xpose.msra.mxu0 0.0
    %148 = vmatprep.subr.mxu0 0.0
    %149 = vmatpush1.xpose.msra.mxu0 0.0
    %150 = vmatprep.subr.mxu0 0.0
    %151 = vmatpush1.xpose.msra.mxu0 0.0
    %152 = vmatprep.subr.mxu0 0.0
    %153 = vmatpush1.xpose.msra.mxu0 0.0
    %154 = vmatprep.subr.mxu0 0.0
    %155 = vmatpush1.xpose.msra.mxu0 0.0
    %156 = vmatprep.subr.mxu0 0.0
    %157 = vmatpush1.xpose.msra.mxu0 0.0
    %158 = vmatprep.subr.mxu0 0.0
    %159 = vmatpush1.xpose.msra.mxu0 0.0
    %160 = vmatprep.subr.mxu0 0.0
    %161 = vmatpush1.xpose.msra.mxu0 0.0
    %162 = vmatprep.subr.mxu0 0.0
    %163 = vmatpush1.xpose.msra.mxu0 0.0
    %164 = vmatprep.subr.mxu0 0.0
    %165 = vmatpush1.xpose.msra.mxu0 0.0
    %166 = vmatprep.subr.mxu0 0.0
    %167 = vmatpush1.xpose.msra.mxu0 0.0
    %168 = vmatprep.subr.mxu0 0.0
    %169 = vmatpush1.xpose.msra.mxu0 %v134
    %170 = vmatprep.subr.mxu0 0.0
    %171 = vmatpush2.xpose.msra.mxu0 0.0
    %172 = vmatprep.subr.mxu0 0.0
    %173 = vmatpush2.xpose.msra.mxu0 0.0
    %174 = vmatprep.subr.mxu0 0.0
    %175 = vmatpush2.xpose.msra.mxu0 0.0
    %176 = vmatprep.subr.mxu0 0.0
    %177 = vmatpush2.xpose.msra.mxu0 0.0
    %178 = vmatprep.subr.mxu0 0.0
    %179 = vmatpush2.xpose.msra.mxu0 0.0
    %180 = vmatprep.subr.mxu0 0.0
    %181 = vmatpush2.xpose.msra.mxu0 0.0
    %182 = vmatprep.subr.mxu0 0.0
    %183 = vmatpush2.xpose.msra.mxu0 0.0
    %184 = vmatprep.subr.mxu0 0.0
    %185 = vmatpush2.xpose.msra.mxu0 0.0
    %186 = vmatprep.subr.mxu0 0.0
    %187 = vmatpush2.xpose.msra.mxu0 0.0
    %188 = vmatprep.subr.mxu0 0.0
    %189 = vmatpush2.xpose.msra.mxu0 0.0
    %190 = vmatprep.subr.mxu0 0.0
    %191 = vmatpush2.xpose.msra.mxu0 0.0
    %192 = vmatprep.subr.mxu0 0.0
    %193 = vmatpush2.xpose.msra.mxu0 0.0
    %194 = vmatprep.subr.mxu0 0.0
    %195 = vmatpush2.xpose.msra.mxu0 0.0
    %196 = vmatprep.subr.mxu0 0.0
    %197 = vmatpush2.xpose.msra.mxu0 0.0
    %198 = vmatprep.subr.mxu0 0.0
    %199 = vmatpush2.xpose.msra.mxu0 0.0
    %200 = vmatprep.subr.mxu0 0.0
    %201 = vmatpush2.xpose.msra.mxu0 0.0
    %202 = vmatprep.mubr.f32.mxu0 0.0
    %203 = vmatmul.mubr.f32.gmra.mxu0 %v135
    %v204 = vpop.f32.mrf.mxu0
    %v205 = vadd.f32 %v137, %v204
    %v206 = vpop.f32.mrf.mxu0
    %207 = vdwg.mxu0
    %vm208 = vcmask 57344
    %209 = vst.msk [vmem:[#allocation8] sm:$0x1] %vm208, %v205
    // Predicated region
    $region30: #{tpu_custom_call.1} parent=1 // pred_check
      _
    $region31: #{tpu_custom_call.1} parent=1 // pred_check_branch
      %211 = sbr.rel (0) target = $region33
    $region32: #{tpu_custom_call.1} parent=1 // pred_region
      %s213 = ssub.s32 16, 16
      %214 = vsyncadd [#allocation5], %s213
      %s216 = sshll.u32 [#allocation8], 4
      %s217 = int_to_ptr.vmem [resolvable:$true] %s216
      %219 = dma.vmem_to_hbm [thread:$0]  %s217, 16, %s5, [#allocation5]
    $region33: #{tpu_custom_call.1} parent=1 // pred_fallthru
      _
    // Predicated region
    $region34: #{tpu_custom_call.1} parent=1 // pred_check
      _
    $region35: #{tpu_custom_call.1} parent=1 // pred_check_branch
      %221 = sbr.rel (0) target = $region37
    $region36: #{tpu_custom_call.1} parent=1 // pred_region
      %222 = dma.done [#allocation5], 16
    $region37: #{tpu_custom_call.1} parent=1 // pred_fallthru
      _
    %223 = vsyncpa [#allocation4], 1
    %224 = vsyncpa [#allocation7], 1
    %225 = vsyncpa [#allocation5], 1

</llo_original>
